<compile_context>
chip_gen: v7x
topology: tpu7x:2x2x1
jax: 0.10.0
libtpu: 0.0.40
codegen_flags: <defaults>
</compile_context>

<pallas_src>
import jax
import jax.numpy as jnp
from jax.experimental import pallas as pl
from jax.experimental.pallas import tpu as pltpu


def _round_up(x, m):
    return ((x + m - 1) // m) * m


def _critic_kernel(xs_ref, xa_ref,
                   w1s_ref, w1a_ref, b1_ref,
                   w2_ref, b2_ref,
                   w3_ref, b3_ref,
                   wo_ref, bo_ref,
                   out_ref):
    """Single invocation: full ensemble, full (padded) batch.

    xs_ref:  (B_pad, obs)        f32   state
    xa_ref:  (B_pad, act)        f32   action
    w1s_ref: (C, obs, H)         bf16  layer-1 weight, state rows
    w1a_ref: (C, act, H)         bf16  layer-1 weight, action rows
    wk_ref:  (C, H, H) / (C,H,Q) bf16  layer-k weights
    bk_ref:  (C, 1, H) / (C,1,Q) f32   biases
    out_ref: (B_pad, CQ_pad)     f32   lane-dense output slab
    """
    xs = xs_ref[...].astype(jnp.bfloat16)
    xa = xa_ref[...].astype(jnp.bfloat16)

    num_critics = w1s_ref.shape[0]
    outs = []
    # C is small & static -> fully unrolled chain of MXU matmuls.
    for c in range(num_critics):
        h = (jnp.dot(xs, w1s_ref[c], preferred_element_type=jnp.float32)
             + jnp.dot(xa, w1a_ref[c], preferred_element_type=jnp.float32)
             + b1_ref[c])
        h = jnp.maximum(h, 0.0).astype(jnp.bfloat16)

        h = jnp.dot(h, w2_ref[c], preferred_element_type=jnp.float32) + b2_ref[c]
        h = jnp.maximum(h, 0.0).astype(jnp.bfloat16)

        h = jnp.dot(h, w3_ref[c], preferred_element_type=jnp.float32) + b3_ref[c]
        h = jnp.maximum(h, 0.0).astype(jnp.bfloat16)

        o = jnp.dot(h, wo_ref[c], preferred_element_type=jnp.float32) + bo_ref[c]
        outs.append(o)                                   # (B_pad, Q) f32

    out = jnp.concatenate(outs, axis=-1)                 # (B_pad, C*Q)
    pad_cols = out_ref.shape[-1] - out.shape[-1]
    if pad_cols > 0:                                     # pad lanes to 128-multiple
        out = jnp.concatenate(
            [out, jnp.zeros((out.shape[0], pad_cols), out.dtype)], axis=-1)
    out_ref[...] = out.astype(out_ref.dtype)             # single lane-dense store


def critic_forward(state, action, params):
    """Ensemble critic forward pass.

    state:  (B, obs)  float32
    action: (B, act)  float32
    params: dict with stacked per-critic f32 weights:
      w1 (C, In, H), b1 (C, 1, H), w2 (C, H, H), b2 (C, 1, H),
      w3 (C, H, H), b3 (C, 1, H), wo (C, H, Q), bo (C, 1, Q)

    Returns quantiles of shape (B, C, Q).
    """
    B, obs = state.shape
    _, act = action.shape
    C, In, H = params["w1"].shape
    Q = params["wo"].shape[-1]
    assert In == obs + act

    # Pad the batch to sublane granularity (multiple of 8) for unmasked vld/vst.
    B_pad = _round_up(max(B, 8), 8)
    if B_pad != B:
        state = jnp.pad(state, ((0, B_pad - B), (0, 0)))
        action = jnp.pad(action, ((0, B_pad - B), (0, 0)))

    # Split layer-1 weight (cheap, weight-side) instead of concatenating
    # [state, action] on the activation path; stream all weights as bf16.
    w1s = params["w1"][:, :obs, :].astype(jnp.bfloat16)
    w1a = params["w1"][:, obs:, :].astype(jnp.bfloat16)
    w2 = params["w2"].astype(jnp.bfloat16)
    w3 = params["w3"].astype(jnp.bfloat16)
    wo = params["wo"].astype(jnp.bfloat16)
    b1, b2, b3, bo = params["b1"], params["b2"], params["b3"], params["bo"]

    CQ = C * Q
    CQ_pad = _round_up(CQ, 128)

    # Advisory cost estimate for XLA's scheduler.
    flops = 2 * C * B_pad * (In * H + 2 * H * H + H * Q)
    weight_bytes = 2 * C * (In * H + 2 * H * H + H * Q)          # bf16 weights
    bias_bytes = 4 * C * (3 * H + Q)                              # f32 biases
    io_bytes = 4 * B_pad * (obs + act + CQ_pad)                   # f32 activations
    cost = pl.CostEstimate(flops=flops, transcendentals=0,
                           bytes_accessed=weight_bytes + bias_bytes + io_bytes)

    # Explicit VMEM budget: everything is resident at once (no pipelining),
    # plus headroom for live activations / compiler scratch.  Clamped to the
    # v7x physical ceiling so the same setting is safe on all generations.
    act_bytes = 4 * B_pad * (obs + act + 4 * H + CQ_pad)
    vmem_bytes = int(min(64 * 2**20,
                         2 * (weight_bytes + bias_bytes + act_bytes) + 8 * 2**20))

    vmem_spec = pl.BlockSpec(memory_space=pltpu.MemorySpace.VMEM)
    out = pl.pallas_call(
        _critic_kernel,
        out_shape=jax.ShapeDtypeStruct((B_pad, CQ_pad), jnp.float32),
        in_specs=[vmem_spec] * 11,
        out_specs=vmem_spec,
        compiler_params=pltpu.CompilerParams(vmem_limit_bytes=vmem_bytes),
        cost_estimate=cost,
    )(state, action, w1s, w1a, b1, w2, b2, w3, b3, wo, bo)

    # torch.stack(dim=1) layout: (B, C, Q)
    return out[:B, :CQ].reshape(B, C, Q)


def init_params(key, observation_size, num_actions, num_quantiles,
                num_critics, hidden_size):
    """Deterministic PyTorch-nn.Linear-style init, stacked over critics."""
    in_size = observation_size + num_actions
    sizes = [in_size] + hidden_size + [num_quantiles]
    names = ["1", "2", "3", "o"]
    assert len(sizes) - 1 == len(names)

    params = {}
    for li, name in enumerate(names):
        fan_in, fan_out = sizes[li], sizes[li + 1]
        bound = 1.0 / (fan_in ** 0.5)
        key, kw, kb = jax.random.split(key, 3)
        params[f"w{name}"] = jax.random.uniform(
            kw, (num_critics, fan_in, fan_out), jnp.float32, -bound, bound)
        params[f"b{name}"] = jax.random.uniform(
            kb, (num_critics, 1, fan_out), jnp.float32, -bound, bound)
    return params


def _reference(state, action, params):
    """Pure-JAX reference mirroring the kernel's bf16-weight quantization."""
    x = jnp.concatenate([state, action], axis=1)
    C = params["w1"].shape[0]
    outs = []
    for c in range(C):
        h = x
        for wn, bn in (("w1", "b1"), ("w2", "b2"), ("w3", "b3")):
            h = jnp.dot(h.astype(jnp.bfloat16),
                        params[wn][c].astype(jnp.bfloat16),
                        preferred_element_type=jnp.float32) + params[bn][c][0]
            h = jnp.maximum(h, 0.0)
        o = jnp.dot(h.astype(jnp.bfloat16),
                    params["wo"][c].astype(jnp.bfloat16),
                    preferred_element_type=jnp.float32) + params["bo"][c][0]
        outs.append(o)
    return jnp.stack(outs, axis=1)


if __name__ == "__main__":
    # Small, module-consistent shapes.
    batch = 4
    observation_size = 8
    num_actions = 4
    num_quantiles = 8
    num_critics = 2
    hidden_size = [32, 32, 32]

    key = jax.random.PRNGKey(0)
    key, ks, ka, kp = jax.random.split(key, 4)
    state = jax.random.normal(ks, (batch, observation_size), jnp.float32)
    action = jax.random.normal(ka, (batch, num_actions), jnp.float32)
    params = init_params(kp, observation_size, num_actions, num_quantiles,
                         num_critics, hidden_size)

    quantiles = critic_forward(state, action, params)
    quantiles = jax.block_until_ready(quantiles)

    assert quantiles.shape == (batch, num_critics, num_quantiles)

    ref = _reference(state, action, params)
    assert jnp.allclose(quantiles, ref, atol=5e-3, rtol=5e-3), (
        "Pallas output mismatch vs JAX reference")

    print("KERNEL_OK")
</pallas_src>

<mosaic_0001>
module attributes {stable_mosaic.version = 11 : i64} {
  func.func @_critic_kernel(%arg0: memref<8x8xf32, #tpu.memory_space<vmem>>, %arg1: memref<8x4xf32, #tpu.memory_space<vmem>>, %arg2: memref<2x8x32xbf16, #tpu.memory_space<vmem>>, %arg3: memref<2x4x32xbf16, #tpu.memory_space<vmem>>, %arg4: memref<2x1x32xf32, #tpu.memory_space<vmem>>, %arg5: memref<2x32x32xbf16, #tpu.memory_space<vmem>>, %arg6: memref<2x1x32xf32, #tpu.memory_space<vmem>>, %arg7: memref<2x32x32xbf16, #tpu.memory_space<vmem>>, %arg8: memref<2x1x32xf32, #tpu.memory_space<vmem>>, %arg9: memref<2x32x8xbf16, #tpu.memory_space<vmem>>, %arg10: memref<2x1x8xf32, #tpu.memory_space<vmem>>, %arg11: memref<8x128xf32, #tpu.memory_space<vmem>>) attributes {dimension_semantics = [], scalar_prefetch = 0 : i64, scratch_operands = 0 : i64, tpu.core_type = #tpu.core_type<tc>} {
    %c0 = arith.constant 0 : index
    %c0_0 = arith.constant 0 : index
    %0 = vector.load %arg0[%c0, %c0_0] : memref<8x8xf32, #tpu.memory_space<vmem>>, vector<8x8xf32>
    %1 = arith.truncf %0 : vector<8x8xf32> to vector<8x8xbf16>
    %c0_1 = arith.constant 0 : index
    %c0_2 = arith.constant 0 : index
    %2 = vector.load %arg1[%c0_1, %c0_2] : memref<8x4xf32, #tpu.memory_space<vmem>>, vector<8x4xf32>
    %3 = arith.truncf %2 : vector<8x4xf32> to vector<8x4xbf16>
    %c0_3 = arith.constant 0 : index
    %c0_4 = arith.constant 0 : index
    %c0_5 = arith.constant 0 : index
    %4 = vector.load %arg2[%c0_3, %c0_4, %c0_5] : memref<2x8x32xbf16, #tpu.memory_space<vmem>>, vector<1x8x32xbf16>
    %5 = vector.shape_cast %4 : vector<1x8x32xbf16> to vector<8x32xbf16>
    %cst = arith.constant dense<0.000000e+00> : vector<8x32xf32>
    %6 = tpu.matmul %1, %5, %cst {dimension_numbers = #tpu.dot_dimension_numbers<[1], [0], [0], [1], [0, 0, 1, 1], [], []>} : vector<8x8xbf16>, vector<8x32xbf16>, vector<8x32xf32> -> vector<8x32xf32>
    %c0_6 = arith.constant 0 : index
    %c0_7 = arith.constant 0 : index
    %c0_8 = arith.constant 0 : index
    %7 = vector.load %arg3[%c0_6, %c0_7, %c0_8] : memref<2x4x32xbf16, #tpu.memory_space<vmem>>, vector<1x4x32xbf16>
    %8 = vector.shape_cast %7 : vector<1x4x32xbf16> to vector<4x32xbf16>
    %cst_9 = arith.constant dense<0.000000e+00> : vector<8x32xf32>
    %9 = tpu.matmul %3, %8, %cst_9 {dimension_numbers = #tpu.dot_dimension_numbers<[1], [0], [0], [1], [0, 0, 1, 1], [], []>} : vector<8x4xbf16>, vector<4x32xbf16>, vector<8x32xf32> -> vector<8x32xf32>
    %10 = arith.addf %6, %9 : vector<8x32xf32>
    %c0_10 = arith.constant 0 : index
    %c0_11 = arith.constant 0 : index
    %c0_12 = arith.constant 0 : index
    %11 = vector.load %arg4[%c0_10, %c0_11, %c0_12] : memref<2x1x32xf32, #tpu.memory_space<vmem>>, vector<1x1x32xf32>
    %12 = vector.shape_cast %11 : vector<1x1x32xf32> to vector<1x32xf32>
    %13 = vector.broadcast %12 : vector<1x32xf32> to vector<8x32xf32>
    %14 = arith.addf %10, %13 : vector<8x32xf32>
    %cst_13 = arith.constant 0.000000e+00 : f32
    %15 = vector.broadcast %cst_13 : f32 to vector<8x32xf32>
    %16 = arith.maximumf %14, %15 : vector<8x32xf32>
    %17 = arith.truncf %16 : vector<8x32xf32> to vector<8x32xbf16>
    %c0_14 = arith.constant 0 : index
    %c0_15 = arith.constant 0 : index
    %c0_16 = arith.constant 0 : index
    %18 = vector.load %arg5[%c0_14, %c0_15, %c0_16] : memref<2x32x32xbf16, #tpu.memory_space<vmem>>, vector<1x32x32xbf16>
    %19 = vector.shape_cast %18 : vector<1x32x32xbf16> to vector<32x32xbf16>
    %cst_17 = arith.constant dense<0.000000e+00> : vector<8x32xf32>
    %20 = tpu.matmul %17, %19, %cst_17 {dimension_numbers = #tpu.dot_dimension_numbers<[1], [0], [0], [1], [0, 0, 1, 1], [], []>} : vector<8x32xbf16>, vector<32x32xbf16>, vector<8x32xf32> -> vector<8x32xf32>
    %c0_18 = arith.constant 0 : index
    %c0_19 = arith.constant 0 : index
    %c0_20 = arith.constant 0 : index
    %21 = vector.load %arg6[%c0_18, %c0_19, %c0_20] : memref<2x1x32xf32, #tpu.memory_space<vmem>>, vector<1x1x32xf32>
    %22 = vector.shape_cast %21 : vector<1x1x32xf32> to vector<1x32xf32>
    %23 = vector.broadcast %22 : vector<1x32xf32> to vector<8x32xf32>
    %24 = arith.addf %20, %23 : vector<8x32xf32>
    %cst_21 = arith.constant 0.000000e+00 : f32
    %25 = vector.broadcast %cst_21 : f32 to vector<8x32xf32>
    %26 = arith.maximumf %24, %25 : vector<8x32xf32>
    %27 = arith.truncf %26 : vector<8x32xf32> to vector<8x32xbf16>
    %c0_22 = arith.constant 0 : index
    %c0_23 = arith.constant 0 : index
    %c0_24 = arith.constant 0 : index
    %28 = vector.load %arg7[%c0_22, %c0_23, %c0_24] : memref<2x32x32xbf16, #tpu.memory_space<vmem>>, vector<1x32x32xbf16>
    %29 = vector.shape_cast %28 : vector<1x32x32xbf16> to vector<32x32xbf16>
    %cst_25 = arith.constant dense<0.000000e+00> : vector<8x32xf32>
    %30 = tpu.matmul %27, %29, %cst_25 {dimension_numbers = #tpu.dot_dimension_numbers<[1], [0], [0], [1], [0, 0, 1, 1], [], []>} : vector<8x32xbf16>, vector<32x32xbf16>, vector<8x32xf32> -> vector<8x32xf32>
    %c0_26 = arith.constant 0 : index
    %c0_27 = arith.constant 0 : index
    %c0_28 = arith.constant 0 : index
    %31 = vector.load %arg8[%c0_26, %c0_27, %c0_28] : memref<2x1x32xf32, #tpu.memory_space<vmem>>, vector<1x1x32xf32>
    %32 = vector.shape_cast %31 : vector<1x1x32xf32> to vector<1x32xf32>
    %33 = vector.broadcast %32 : vector<1x32xf32> to vector<8x32xf32>
    %34 = arith.addf %30, %33 : vector<8x32xf32>
    %cst_29 = arith.constant 0.000000e+00 : f32
    %35 = vector.broadcast %cst_29 : f32 to vector<8x32xf32>
    %36 = arith.maximumf %34, %35 : vector<8x32xf32>
    %37 = arith.truncf %36 : vector<8x32xf32> to vector<8x32xbf16>
    %c0_30 = arith.constant 0 : index
    %c0_31 = arith.constant 0 : index
    %c0_32 = arith.constant 0 : index
    %38 = vector.load %arg9[%c0_30, %c0_31, %c0_32] : memref<2x32x8xbf16, #tpu.memory_space<vmem>>, vector<1x32x8xbf16>
    %39 = vector.shape_cast %38 : vector<1x32x8xbf16> to vector<32x8xbf16>
    %cst_33 = arith.constant dense<0.000000e+00> : vector<8x8xf32>
    %40 = tpu.matmul %37, %39, %cst_33 {dimension_numbers = #tpu.dot_dimension_numbers<[1], [0], [0], [1], [0, 0, 1, 1], [], []>} : vector<8x32xbf16>, vector<32x8xbf16>, vector<8x8xf32> -> vector<8x8xf32>
    %c0_34 = arith.constant 0 : index
    %c0_35 = arith.constant 0 : index
    %c0_36 = arith.constant 0 : index
    %41 = vector.load %arg10[%c0_34, %c0_35, %c0_36] : memref<2x1x8xf32, #tpu.memory_space<vmem>>, vector<1x1x8xf32>
    %42 = vector.shape_cast %41 : vector<1x1x8xf32> to vector<1x8xf32>
    %43 = vector.broadcast %42 : vector<1x8xf32> to vector<8x8xf32>
    %44 = arith.addf %40, %43 : vector<8x8xf32>
    %c1 = arith.constant 1 : index
    %c0_37 = arith.constant 0 : index
    %c0_38 = arith.constant 0 : index
    %45 = vector.load %arg2[%c1, %c0_37, %c0_38] : memref<2x8x32xbf16, #tpu.memory_space<vmem>>, vector<1x8x32xbf16>
    %46 = vector.shape_cast %45 : vector<1x8x32xbf16> to vector<8x32xbf16>
    %cst_39 = arith.constant dense<0.000000e+00> : vector<8x32xf32>
    %47 = tpu.matmul %1, %46, %cst_39 {dimension_numbers = #tpu.dot_dimension_numbers<[1], [0], [0], [1], [0, 0, 1, 1], [], []>} : vector<8x8xbf16>, vector<8x32xbf16>, vector<8x32xf32> -> vector<8x32xf32>
    %c1_40 = arith.constant 1 : index
    %c0_41 = arith.constant 0 : index
    %c0_42 = arith.constant 0 : index
    %48 = vector.load %arg3[%c1_40, %c0_41, %c0_42] : memref<2x4x32xbf16, #tpu.memory_space<vmem>>, vector<1x4x32xbf16>
    %49 = vector.shape_cast %48 : vector<1x4x32xbf16> to vector<4x32xbf16>
    %cst_43 = arith.constant dense<0.000000e+00> : vector<8x32xf32>
    %50 = tpu.matmul %3, %49, %cst_43 {dimension_numbers = #tpu.dot_dimension_numbers<[1], [0], [0], [1], [0, 0, 1, 1], [], []>} : vector<8x4xbf16>, vector<4x32xbf16>, vector<8x32xf32> -> vector<8x32xf32>
    %51 = arith.addf %47, %50 : vector<8x32xf32>
    %c1_44 = arith.constant 1 : index
    %c0_45 = arith.constant 0 : index
    %c0_46 = arith.constant 0 : index
    %52 = vector.load %arg4[%c1_44, %c0_45, %c0_46] : memref<2x1x32xf32, #tpu.memory_space<vmem>>, vector<1x1x32xf32>
    %53 = vector.shape_cast %52 : vector<1x1x32xf32> to vector<1x32xf32>
    %54 = vector.broadcast %53 : vector<1x32xf32> to vector<8x32xf32>
    %55 = arith.addf %51, %54 : vector<8x32xf32>
    %cst_47 = arith.constant 0.000000e+00 : f32
    %56 = vector.broadcast %cst_47 : f32 to vector<8x32xf32>
    %57 = arith.maximumf %55, %56 : vector<8x32xf32>
    %58 = arith.truncf %57 : vector<8x32xf32> to vector<8x32xbf16>
    %c1_48 = arith.constant 1 : index
    %c0_49 = arith.constant 0 : index
    %c0_50 = arith.constant 0 : index
    %59 = vector.load %arg5[%c1_48, %c0_49, %c0_50] : memref<2x32x32xbf16, #tpu.memory_space<vmem>>, vector<1x32x32xbf16>
    %60 = vector.shape_cast %59 : vector<1x32x32xbf16> to vector<32x32xbf16>
    %cst_51 = arith.constant dense<0.000000e+00> : vector<8x32xf32>
    %61 = tpu.matmul %58, %60, %cst_51 {dimension_numbers = #tpu.dot_dimension_numbers<[1], [0], [0], [1], [0, 0, 1, 1], [], []>} : vector<8x32xbf16>, vector<32x32xbf16>, vector<8x32xf32> -> vector<8x32xf32>
    %c1_52 = arith.constant 1 : index
    %c0_53 = arith.constant 0 : index
    %c0_54 = arith.constant 0 : index
    %62 = vector.load %arg6[%c1_52, %c0_53, %c0_54] : memref<2x1x32xf32, #tpu.memory_space<vmem>>, vector<1x1x32xf32>
    %63 = vector.shape_cast %62 : vector<1x1x32xf32> to vector<1x32xf32>
    %64 = vector.broadcast %63 : vector<1x32xf32> to vector<8x32xf32>
    %65 = arith.addf %61, %64 : vector<8x32xf32>
    %cst_55 = arith.constant 0.000000e+00 : f32
    %66 = vector.broadcast %cst_55 : f32 to vector<8x32xf32>
    %67 = arith.maximumf %65, %66 : vector<8x32xf32>
    %68 = arith.truncf %67 : vector<8x32xf32> to vector<8x32xbf16>
    %c1_56 = arith.constant 1 : index
    %c0_57 = arith.constant 0 : index
    %c0_58 = arith.constant 0 : index
    %69 = vector.load %arg7[%c1_56, %c0_57, %c0_58] : memref<2x32x32xbf16, #tpu.memory_space<vmem>>, vector<1x32x32xbf16>
    %70 = vector.shape_cast %69 : vector<1x32x32xbf16> to vector<32x32xbf16>
    %cst_59 = arith.constant dense<0.000000e+00> : vector<8x32xf32>
    %71 = tpu.matmul %68, %70, %cst_59 {dimension_numbers = #tpu.dot_dimension_numbers<[1], [0], [0], [1], [0, 0, 1, 1], [], []>} : vector<8x32xbf16>, vector<32x32xbf16>, vector<8x32xf32> -> vector<8x32xf32>
    %c1_60 = arith.constant 1 : index
    %c0_61 = arith.constant 0 : index
    %c0_62 = arith.constant 0 : index
    %72 = vector.load %arg8[%c1_60, %c0_61, %c0_62] : memref<2x1x32xf32, #tpu.memory_space<vmem>>, vector<1x1x32xf32>
    %73 = vector.shape_cast %72 : vector<1x1x32xf32> to vector<1x32xf32>
    %74 = vector.broadcast %73 : vector<1x32xf32> to vector<8x32xf32>
    %75 = arith.addf %71, %74 : vector<8x32xf32>
    %cst_63 = arith.constant 0.000000e+00 : f32
    %76 = vector.broadcast %cst_63 : f32 to vector<8x32xf32>
    %77 = arith.maximumf %75, %76 : vector<8x32xf32>
    %78 = arith.truncf %77 : vector<8x32xf32> to vector<8x32xbf16>
    %c1_64 = arith.constant 1 : index
    %c0_65 = arith.constant 0 : index
    %c0_66 = arith.constant 0 : index
    %79 = vector.load %arg9[%c1_64, %c0_65, %c0_66] : memref<2x32x8xbf16, #tpu.memory_space<vmem>>, vector<1x32x8xbf16>
    %80 = vector.shape_cast %79 : vector<1x32x8xbf16> to vector<32x8xbf16>
    %cst_67 = arith.constant dense<0.000000e+00> : vector<8x8xf32>
    %81 = tpu.matmul %78, %80, %cst_67 {dimension_numbers = #tpu.dot_dimension_numbers<[1], [0], [0], [1], [0, 0, 1, 1], [], []>} : vector<8x32xbf16>, vector<32x8xbf16>, vector<8x8xf32> -> vector<8x8xf32>
    %c1_68 = arith.constant 1 : index
    %c0_69 = arith.constant 0 : index
    %c0_70 = arith.constant 0 : index
    %82 = vector.load %arg10[%c1_68, %c0_69, %c0_70] : memref<2x1x8xf32, #tpu.memory_space<vmem>>, vector<1x1x8xf32>
    %83 = vector.shape_cast %82 : vector<1x1x8xf32> to vector<1x8xf32>
    %84 = vector.broadcast %83 : vector<1x8xf32> to vector<8x8xf32>
    %85 = arith.addf %81, %84 : vector<8x8xf32>
    %86 = tpu.concatenate %44, %85 in 1 : vector<8x8xf32>, vector<8x8xf32> -> vector<8x16xf32>
    %cst_71 = arith.constant 0.000000e+00 : f32
    %87 = vector.broadcast %cst_71 : f32 to vector<8x112xf32>
    %88 = tpu.concatenate %86, %87 in 1 : vector<8x16xf32>, vector<8x112xf32> -> vector<8x128xf32>
    %c0_72 = arith.constant 0 : index
    %c0_73 = arith.constant 0 : index
    %89 = vector.load %arg11[%c0_72, %c0_73] : memref<8x128xf32, #tpu.memory_space<vmem>>, vector<8x128xf32>
    tpu.vector_store %arg11[%c0_72, %c0_73], %88 {strides = array<i32>} : memref<8x128xf32, #tpu.memory_space<vmem>>, vector<8x128xf32>,
    return
  }
}

</mosaic_0001>

<llo_original>
// kernel: tpu_custom_call.1
$region0: #{tpu_custom_call.1}
  #allocation0 [shape = 'u32[]', space=smem, size = 0x4, offset = 0x4, fixed_abs, tag = 'smem constant byte address 0x4 - core index']
  #allocation1 [shape = 'u32[144,128]{1,0:T(1,128)}', space=vmem, size = 0x12000, scoped, tag = 'internal scratch']
  %s0 = inlined_call_operand.hbm [shape: f32[8,8], index: 0, kind: input, shape index: {}]
  %s1 = inlined_call_operand.vmem [shape: f32[8,4], index: 1, kind: input, shape index: {}]
  %s2 = inlined_call_operand.hbm [shape: bf16[2,8,32], index: 2, kind: input, shape index: {}]
  %s3 = inlined_call_operand.hbm [shape: bf16[2,4,32], index: 3, kind: input, shape index: {}]
  %s4 = inlined_call_operand.vmem [shape: f32[2,1,32], index: 4, kind: input, shape index: {}]
  %s5 = inlined_call_operand.vmem [shape: bf16[2,32,32], index: 5, kind: input, shape index: {}]
  %s6 = inlined_call_operand.hbm [shape: f32[2,1,32], index: 6, kind: input, shape index: {}]
  %s7 = inlined_call_operand.vmem [shape: bf16[2,32,32], index: 7, kind: input, shape index: {}]
  %s8 = inlined_call_operand.vmem [shape: f32[2,1,32], index: 8, kind: input, shape index: {}]
  %s9 = inlined_call_operand.vmem [shape: bf16[2,32,8], index: 9, kind: input, shape index: {}]
  %s10 = inlined_call_operand.vmem [shape: f32[2,1,8], index: 10, kind: input, shape index: {}]
  %s11 = inlined_call_operand.hbm [shape: f32[8,128], index: 11, kind: output, shape index: {}]
  %s12 = sld [smem:[#allocation0]]
  $region70: #{tpu_custom_call.1} parent=0
    _
  %s14 = ssub.s32 1, %s12
  %s15 = scalar_select 0, %s14, %s12
  $region1: #{tpu_custom_call.1} parent=0
    #allocation2 [shape = 'u8[4096]{0}', space=vmem, size = 0x1000, scoped, tag = 'input window, operand 0, single buffered']
    #allocation3 [shape = 's32[1]{0}', space=sflag, size = 0x4, scoped, tag = 'scoped memory for tpu_custom_call.1']
    #allocation4 [shape = 's32[1]{0}', space=sflag, size = 0x4, scoped, tag = 'scoped memory for tpu_custom_call.1']
    #allocation5 [shape = 'u8[4096]{0}', space=vmem, size = 0x1000, scoped, tag = 'input window, operand 2, single buffered']
    #allocation6 [shape = 's32[1]{0}', space=sflag, size = 0x4, scoped, tag = 'scoped memory for tpu_custom_call.1']
    #allocation7 [shape = 'u8[2048]{0}', space=vmem, size = 0x800, scoped, tag = 'input window, operand 3, single buffered']
    #allocation8 [shape = 'u8[1024]{0}', space=vmem, size = 0x400, scoped, tag = 'input window, operand 6, single buffered']
    #allocation9 [shape = 's32[1]{0}', space=sflag, size = 0x4, scoped, tag = 'scoped memory for tpu_custom_call.1']
    #allocation10 [shape = 'u8[4096]{0}', space=vmem, size = 0x1000, scoped, tag = 'output window, operand 0, single buffered']
    %16 = vsyncpa [#allocation3], 0
    %17 = vsyncpa [#allocation6], 0
    %18 = vsyncpa [#allocation9], 0
    %19 = vsyncpa [#allocation4], 0
    // Predicated region
    $region2: #{tpu_custom_call.1} parent=1 // pred_check
      _
    $region3: #{tpu_custom_call.1} parent=1 // pred_check_branch
      %21 = sbr.rel (0) target = $region5
    $region4: #{tpu_custom_call.1} parent=1 // pred_region
      %s23 = ssub.s32 128, 128
      %24 = vsyncadd [#allocation3], %s23
      %s26 = sshll.u32 [#allocation2], 4
      %s27 = int_to_ptr.vmem [resolvable:$true] %s26
      %29 = dma.hbm_to_vmem [thread:$0]  %s0, 128, %s27, [#allocation3]
    $region5: #{tpu_custom_call.1} parent=1 // pred_fallthru
      _
    // Predicated region
    $region6: #{tpu_custom_call.1} parent=1 // pred_check
      _
    $region7: #{tpu_custom_call.1} parent=1 // pred_check_branch
      %31 = sbr.rel (0) target = $region9
    $region8: #{tpu_custom_call.1} parent=1 // pred_region
      _
    $region9: #{tpu_custom_call.1} parent=1 // pred_fallthru
      _
    // Predicated region
    $region10: #{tpu_custom_call.1} parent=1 // pred_check
      _
    $region11: #{tpu_custom_call.1} parent=1 // pred_check_branch
      %33 = sbr.rel (0) target = $region13
    $region12: #{tpu_custom_call.1} parent=1 // pred_region
      %s35 = ssub.s32 128, 128
      %36 = vsyncadd [#allocation6], %s35
      %s37 = sshll.u32 [#allocation5], 4
      %s38 = int_to_ptr.vmem [resolvable:$true] %s37
      %43 = dma.hbm_to_vmem [thread:$0]  %s2, 128, %s38, [#allocation6], 64, 64, 4
    $region13: #{tpu_custom_call.1} parent=1 // pred_fallthru
      _
    // Predicated region
    $region14: #{tpu_custom_call.1} parent=1 // pred_check
      _
    $region15: #{tpu_custom_call.1} parent=1 // pred_check_branch
      %45 = sbr.rel (0) target = $region17
    $region16: #{tpu_custom_call.1} parent=1 // pred_region
      %s47 = ssub.s32 64, 64
      %48 = vsyncadd [#allocation6], %s47
      %s49 = sshll.u32 [#allocation7], 4
      %s50 = int_to_ptr.vmem [resolvable:$true] %s49
      %55 = dma.hbm_to_vmem [thread:$0]  %s3, 64, %s50, [#allocation6], 32, 32, 2
    $region17: #{tpu_custom_call.1} parent=1 // pred_fallthru
      _
    // Predicated region
    $region18: #{tpu_custom_call.1} parent=1 // pred_check
      _
    $region19: #{tpu_custom_call.1} parent=1 // pred_check_branch
      %57 = sbr.rel (0) target = $region21
    $region20: #{tpu_custom_call.1} parent=1 // pred_region
      _
    $region21: #{tpu_custom_call.1} parent=1 // pred_fallthru
      _
    // Predicated region
    $region22: #{tpu_custom_call.1} parent=1 // pred_check
      _
    $region23: #{tpu_custom_call.1} parent=1 // pred_check_branch
      %59 = sbr.rel (0) target = $region25
    $region24: #{tpu_custom_call.1} parent=1 // pred_region
      _
    $region25: #{tpu_custom_call.1} parent=1 // pred_fallthru
      _
    // Predicated region
    $region26: #{tpu_custom_call.1} parent=1 // pred_check
      _
    $region27: #{tpu_custom_call.1} parent=1 // pred_check_branch
      %61 = sbr.rel (0) target = $region29
    $region28: #{tpu_custom_call.1} parent=1 // pred_region
      %s63 = ssub.s32 32, 32
      %64 = vsyncadd [#allocation9], %s63
      %s65 = sshll.u32 [#allocation8], 4
      %s66 = int_to_ptr.vmem [resolvable:$true] %s65
      %71 = dma.hbm_to_vmem [thread:$0]  %s6, 32, %s66, [#allocation9], 16, 16, 1
    $region29: #{tpu_custom_call.1} parent=1 // pred_fallthru
      _
    // Predicated region
    $region30: #{tpu_custom_call.1} parent=1 // pred_check
      _
    $region31: #{tpu_custom_call.1} parent=1 // pred_check_branch
      %73 = sbr.rel (0) target = $region33
    $region32: #{tpu_custom_call.1} parent=1 // pred_region
      _
    $region33: #{tpu_custom_call.1} parent=1 // pred_fallthru
      _
    // Predicated region
    $region34: #{tpu_custom_call.1} parent=1 // pred_check
      _
    $region35: #{tpu_custom_call.1} parent=1 // pred_check_branch
      %75 = sbr.rel (0) target = $region37
    $region36: #{tpu_custom_call.1} parent=1 // pred_region
      _
    $region37: #{tpu_custom_call.1} parent=1 // pred_fallthru
      _
    // Predicated region
    $region38: #{tpu_custom_call.1} parent=1 // pred_check
      _
    $region39: #{tpu_custom_call.1} parent=1 // pred_check_branch
      %77 = sbr.rel (0) target = $region41
    $region40: #{tpu_custom_call.1} parent=1 // pred_region
      _
    $region41: #{tpu_custom_call.1} parent=1 // pred_fallthru
      _
    // Predicated region
    $region42: #{tpu_custom_call.1} parent=1 // pred_check
      _
    $region43: #{tpu_custom_call.1} parent=1 // pred_check_branch
      %79 = sbr.rel (0) target = $region45
    $region44: #{tpu_custom_call.1} parent=1 // pred_region
      _
    $region45: #{tpu_custom_call.1} parent=1 // pred_fallthru
      _
    // Predicated region
    $region46: #{tpu_custom_call.1} parent=1 // pred_check
      _
    $region47: #{tpu_custom_call.1} parent=1 // pred_check_branch
      %81 = sbr.rel (0) target = $region49
    $region48: #{tpu_custom_call.1} parent=1 // pred_region
      %82 = dma.done [#allocation3], 128
    $region49: #{tpu_custom_call.1} parent=1 // pred_fallthru
      _
    // Predicated region
    $region50: #{tpu_custom_call.1} parent=1 // pred_check
      _
    $region51: #{tpu_custom_call.1} parent=1 // pred_check_branch
      %84 = sbr.rel (0) target = $region53
    $region52: #{tpu_custom_call.1} parent=1 // pred_region
      %85 = dma.done [#allocation6], 128
    $region53: #{tpu_custom_call.1} parent=1 // pred_fallthru
      _
    // Predicated region
    $region54: #{tpu_custom_call.1} parent=1 // pred_check
      _
    $region55: #{tpu_custom_call.1} parent=1 // pred_check_branch
      %87 = sbr.rel (0) target = $region57
    $region56: #{tpu_custom_call.1} parent=1 // pred_region
      %88 = dma.done [#allocation6], 64
    $region57: #{tpu_custom_call.1} parent=1 // pred_fallthru
      _
    // Predicated region
    $region58: #{tpu_custom_call.1} parent=1 // pred_check
      _
    $region59: #{tpu_custom_call.1} parent=1 // pred_check_branch
      %90 = sbr.rel (0) target = $region61
    $region60: #{tpu_custom_call.1} parent=1 // pred_region
      %91 = dma.done [#allocation9], 32
    $region61: #{tpu_custom_call.1} parent=1 // pred_fallthru
      _
    %v93 = vld [vmem:[#allocation2] sm:$0xff]
    %v94 = vpack.c.bf16 %v93, %v93
    %v95 = vld [vmem:[%s1] sm:$0xff]
    %v96 = vpack.c.bf16 %v95, %v95
    %v97 = vld [vmem:[#allocation5] sm:$0xf]
    %v98 = vld [vmem:[#allocation7] sm:$0x3]
    %vm99 = vcmask 31744
    %v101 = vsel %vm99, %v96, 0
    %vm103 = vcmask 1041408
    %v105 = vsel %vm103, %v98, 0
    %107 = vmatprep.subr.bf16.mxu0 0
    %108 = vmatpush1.bf16.msra.mxu0 %v105
    %109 = vmatprep.subr.bf16.mxu0 0
    %110 = vmatpush1.bf16.msra.mxu0 0
    %111 = vmatprep.subr.bf16.mxu0 0
    %112 = vmatpush1.bf16.msra.mxu0 0
    %113 = vmatprep.subr.bf16.mxu0 0
    %114 = vmatpush1.bf16.msra.mxu0 0
    %115 = vmatprep.subr.bf16.mxu0 0
    %116 = vmatpush1.bf16.msra.mxu0 0
    %117 = vmatprep.subr.bf16.mxu0 0
    %118 = vmatpush1.bf16.msra.mxu0 0
    %119 = vmatprep.subr.bf16.mxu0 0
    %120 = vmatpush1.bf16.msra.mxu0 0
    %121 = vmatprep.subr.bf16.mxu0 0
    %122 = vmatpush1.bf16.msra.mxu0 0
    %123 = vmatprep.subr.bf16.mxu0 0
    %124 = vmatpush1.bf16.msra.mxu0 0
    %125 = vmatprep.subr.bf16.mxu0 0
    %126 = vmatpush1.bf16.msra.mxu0 0
    %127 = vmatprep.subr.bf16.mxu0 0
    %128 = vmatpush1.bf16.msra.mxu0 0
    %129 = vmatprep.subr.bf16.mxu0 0
    %130 = vmatpush1.bf16.msra.mxu0 0
    %131 = vmatprep.subr.bf16.mxu0 0
    %132 = vmatpush1.bf16.msra.mxu0 0
    %133 = vmatprep.subr.bf16.mxu0 0
    %134 = vmatpush1.bf16.msra.mxu0 0
    %135 = vmatprep.subr.bf16.mxu0 0
    %136 = vmatpush1.bf16.msra.mxu0 0
    %137 = vmatprep.subr.bf16.mxu0 0
    %138 = vmatpush1.bf16.msra.mxu0 0
    %139 = vmatprep.mubr.bf16.mxu0 0
    %140 = vmatmul.mubr.bf16.gmra.mrb[0].mxu0 %v101
    %v141 = vpop.f32.mrb[0].mxu0
    %v142 = vadd.f32 0.0, %v141
    %v143 = vpop.f32.mrb[0].mxu0
    %v144 = vpop.f32.mrb[0].mxu0
    %v145 = vpop.f32.mrb[0].mxu0
    %146 = vdwg.mxu0
    %vm147 = vcmask 64512
    %v149 = vsel %vm147, %v94, 0
    %vm151 = vcmask 1043456
    %v153 = vsel %vm151, %v97, 0
    %155 = vmatprep.subr.bf16.mxu0 0
    %156 = vmatpush1.bf16.msra.mxu0 %v153
    %157 = vmatprep.subr.bf16.mxu0 0
    %158 = vmatpush1.bf16.msra.mxu0 0
    %159 = vmatprep.subr.bf16.mxu0 0
    %160 = vmatpush1.bf16.msra.mxu0 0
    %161 = vmatprep.subr.bf16.mxu0 0
    %162 = vmatpush1.bf16.msra.mxu0 0
    %163 = vmatprep.subr.bf16.mxu0 0
    %164 = vmatpush1.bf16.msra.mxu0 0
    %165 = vmatprep.subr.bf16.mxu0 0
    %166 = vmatpush1.bf16.msra.mxu0 0
    %167 = vmatprep.subr.bf16.mxu0 0
    %168 = vmatpush1.bf16.msra.mxu0 0
    %169 = vmatprep.subr.bf16.mxu0 0
    %170 = vmatpush1.bf16.msra.mxu0 0
    %171 = vmatprep.subr.bf16.mxu0 0
    %172 = vmatpush1.bf16.msra.mxu0 0
    %173 = vmatprep.subr.bf16.mxu0 0
    %174 = vmatpush1.bf16.msra.mxu0 0
    %175 = vmatprep.subr.bf16.mxu0 0
    %176 = vmatpush1.bf16.msra.mxu0 0
    %177 = vmatprep.subr.bf16.mxu0 0
    %178 = vmatpush1.bf16.msra.mxu0 0
    %179 = vmatprep.subr.bf16.mxu0 0
    %180 = vmatpush1.bf16.msra.mxu0 0
    %181 = vmatprep.subr.bf16.mxu0 0
    %182 = vmatpush1.bf16.msra.mxu0 0
    %183 = vmatprep.subr.bf16.mxu0 0
    %184 = vmatpush1.bf16.msra.mxu0 0
    %185 = vmatprep.subr.bf16.mxu0 0
    %186 = vmatpush1.bf16.msra.mxu0 0
    %187 = vmatprep.mubr.bf16.mxu0 0
    %188 = vmatmul.mubr.bf16.gmra.mrb[0].mxu0 %v149
    %v189 = vpop.f32.mrb[0].mxu0
    %v190 = vadd.f32 %v142, %v189
    %v191 = vpop.f32.mrb[0].mxu0
    %v192 = vpop.f32.mrb[0].mxu0
    %v193 = vpop.f32.mrb[0].mxu0
    %194 = vdwg.mxu0
    %v195 = vld [vmem:[%s4] sm:$0x1]
    %v197 = vlaneseq
    %v198 = vshrl.u32 %v197, 7
    %v199 = vsub.s32 0, %v198
    %v200 = vrot.slane %v195, %v199
    %v202 = vadd.f32 %v190, %v200
    %v203 = vmax.f32 %v202, 0.0
    %v204 = vpack.c.bf16 %v203, %v203
    %v205 = vld [vmem:[%s5] sm:$0xf]
    %v206 = vld [vmem:[%s5 + $0x4] sm:$0xf]
    %v207 = vld [vmem:[%s5 + $0x8] sm:$0xf]
    %v208 = vld [vmem:[%s5 + $0xc] sm:$0xf]
    %v209 = vld [vmem:[#allocation8] sm:$0x1]
    %v211 = vlaneseq
    %v212 = vshrl.u32 %v211, 7
    %v213 = vsub.s32 0, %v212
    %v214 = vrot.slane %v209, %v213
    %v220 = vunpack.c.l.b16 %v205
    %v221 = vunpack.c.l.b16 %v206
    %v222 = vunpack.c.l.b16 %v207
    %v223 = vunpack.c.l.b16 %v208
    %v224 = vpack.c.b16 %v221, %v220
    %v225 = vpack.c.b16 %v223, %v222
    %vm228 = vcmask 261120
    %v230 = vsel %vm228, %v204, 0
    %232 = vmatprep.subr.bf16.mxu0 0
    %233 = vmatpush1.bf16.msra.mxu0 %v224
    %234 = vmatprep.subr.bf16.mxu0 0
    %235 = vmatpush1.bf16.msra.mxu0 %v225
    %236 = vmatprep.subr.bf16.mxu0 0
    %237 = vmatpush1.bf16.msra.mxu0 0
    %238 = vmatprep.subr.bf16.mxu0 0
    %239 = vmatpush1.bf16.msra.mxu0 0
    %240 = vmatprep.subr.bf16.mxu0 0
    %241 = vmatpush1.bf16.msra.mxu0 0
    %242 = vmatprep.subr.bf16.mxu0 0
    %243 = vmatpush1.bf16.msra.mxu0 0
    %244 = vmatprep.subr.bf16.mxu0 0
    %245 = vmatpush1.bf16.msra.mxu0 0
    %246 = vmatprep.subr.bf16.mxu0 0
    %247 = vmatpush1.bf16.msra.mxu0 0
    %248 = vmatprep.subr.bf16.mxu0 0
    %249 = vmatpush1.bf16.msra.mxu0 0
    %250 = vmatprep.subr.bf16.mxu0 0
    %251 = vmatpush1.bf16.msra.mxu0 0
    %252 = vmatprep.subr.bf16.mxu0 0
    %253 = vmatpush1.bf16.msra.mxu0 0
    %254 = vmatprep.subr.bf16.mxu0 0
    %255 = vmatpush1.bf16.msra.mxu0 0
    %256 = vmatprep.subr.bf16.mxu0 0
    %257 = vmatpush1.bf16.msra.mxu0 0
    %258 = vmatprep.subr.bf16.mxu0 0
    %259 = vmatpush1.bf16.msra.mxu0 0
    %260 = vmatprep.subr.bf16.mxu0 0
    %261 = vmatpush1.bf16.msra.mxu0 0
    %262 = vmatprep.subr.bf16.mxu0 0
    %263 = vmatpush1.bf16.msra.mxu0 0
    %264 = vmatprep.mubr.bf16.mxu0 0
    %265 = vmatmul.mubr.bf16.gmra.mrb[0].mxu0 %v230
    %v266 = vpop.f32.mrb[0].mxu0
    %v267 = vadd.f32 %v214, %v266
    %v268 = vpop.f32.mrb[0].mxu0
    %v269 = vpop.f32.mrb[0].mxu0
    %v270 = vpop.f32.mrb[0].mxu0
    %271 = vdwg.mxu0
    %v272 = vmax.f32 %v267, 0.0
    %v273 = vpack.c.bf16 %v272, %v272
    %v274 = vld [vmem:[%s7] sm:$0xf]
    %v275 = vld [vmem:[%s7 + $0x4] sm:$0xf]
    %v276 = vld [vmem:[%s7 + $0x8] sm:$0xf]
    %v277 = vld [vmem:[%s7 + $0xc] sm:$0xf]
    %v278 = vld [vmem:[%s8] sm:$0x1]
    %v280 = vlaneseq
    %v281 = vshrl.u32 %v280, 7
    %v282 = vsub.s32 0, %v281
    %v283 = vrot.slane %v278, %v282
    %v289 = vunpack.c.l.b16 %v274
    %v290 = vunpack.c.l.b16 %v275
    %v291 = vunpack.c.l.b16 %v276
    %v292 = vunpack.c.l.b16 %v277
    %v293 = vpack.c.b16 %v290, %v289
    %v294 = vpack.c.b16 %v292, %v291
    %v298 = vsel %vm228, %v273, 0
    %300 = vmatprep.subr.bf16.mxu0 0
    %301 = vmatpush1.bf16.msra.mxu0 %v293
    %302 = vmatprep.subr.bf16.mxu0 0
    %303 = vmatpush1.bf16.msra.mxu0 %v294
    %304 = vmatprep.subr.bf16.mxu0 0
    %305 = vmatpush1.bf16.msra.mxu0 0
    %306 = vmatprep.subr.bf16.mxu0 0
    %307 = vmatpush1.bf16.msra.mxu0 0
    %308 = vmatprep.subr.bf16.mxu0 0
    %309 = vmatpush1.bf16.msra.mxu0 0
    %310 = vmatprep.subr.bf16.mxu0 0
    %311 = vmatpush1.bf16.msra.mxu0 0
    %312 = vmatprep.subr.bf16.mxu0 0
    %313 = vmatpush1.bf16.msra.mxu0 0
    %314 = vmatprep.subr.bf16.mxu0 0
    %315 = vmatpush1.bf16.msra.mxu0 0
    %316 = vmatprep.subr.bf16.mxu0 0
    %317 = vmatpush1.bf16.msra.mxu0 0
    %318 = vmatprep.subr.bf16.mxu0 0
    %319 = vmatpush1.bf16.msra.mxu0 0
    %320 = vmatprep.subr.bf16.mxu0 0
    %321 = vmatpush1.bf16.msra.mxu0 0
    %322 = vmatprep.subr.bf16.mxu0 0
    %323 = vmatpush1.bf16.msra.mxu0 0
    %324 = vmatprep.subr.bf16.mxu0 0
    %325 = vmatpush1.bf16.msra.mxu0 0
    %326 = vmatprep.subr.bf16.mxu0 0
    %327 = vmatpush1.bf16.msra.mxu0 0
    %328 = vmatprep.subr.bf16.mxu0 0
    %329 = vmatpush1.bf16.msra.mxu0 0
    %330 = vmatprep.subr.bf16.mxu0 0
    %331 = vmatpush1.bf16.msra.mxu0 0
    %332 = vmatprep.mubr.bf16.mxu0 0
    %333 = vmatmul.mubr.bf16.gmra.mrb[0].mxu0 %v298
    %v334 = vpop.f32.mrb[0].mxu0
    %v335 = vadd.f32 %v283, %v334
    %v336 = vpop.f32.mrb[0].mxu0
    %v337 = vpop.f32.mrb[0].mxu0
    %v338 = vpop.f32.mrb[0].mxu0
    %339 = vdwg.mxu0
    %v340 = vmax.f32 %v335, 0.0
    %v341 = vpack.c.bf16 %v340, %v340
    %v342 = vld [vmem:[%s9] sm:$0xf]
    %v343 = vld [vmem:[%s9 + $0x4] sm:$0xf]
    %v344 = vld [vmem:[%s9 + $0x8] sm:$0xf]
    %v345 = vld [vmem:[%s9 + $0xc] sm:$0xf]
    %v346 = vld [vmem:[%s10] sm:$0x1]
    %v348 = vlaneseq
    %v349 = vshrl.u32 %v348, 7
    %v350 = vsub.s32 0, %v349
    %v351 = vrot.slane %v346, %v350
    %v357 = vunpack.c.l.b16 %v342
    %v358 = vunpack.c.l.b16 %v343
    %v359 = vunpack.c.l.b16 %v344
    %v360 = vunpack.c.l.b16 %v345
    %v361 = vpack.c.b16 %v358, %v357
    %v362 = vpack.c.b16 %v360, %v359
    %v366 = vsel %vm228, %v341, 0
    %368 = vmatprep.subr.bf16.mxu0 0
    %369 = vmatpush1.bf16.msra.mxu0 %v361
    %370 = vmatprep.subr.bf16.mxu0 0
    %371 = vmatpush1.bf16.msra.mxu0 %v362
    %372 = vmatprep.subr.bf16.mxu0 0
    %373 = vmatpush1.bf16.msra.mxu0 0
    %374 = vmatprep.subr.bf16.mxu0 0
    %375 = vmatpush1.bf16.msra.mxu0 0
    %376 = vmatprep.subr.bf16.mxu0 0
    %377 = vmatpush1.bf16.msra.mxu0 0
    %378 = vmatprep.subr.bf16.mxu0 0
    %379 = vmatpush1.bf16.msra.mxu0 0
    %380 = vmatprep.subr.bf16.mxu0 0
    %381 = vmatpush1.bf16.msra.mxu0 0
    %382 = vmatprep.subr.bf16.mxu0 0
    %383 = vmatpush1.bf16.msra.mxu0 0
    %384 = vmatprep.subr.bf16.mxu0 0
    %385 = vmatpush1.bf16.msra.mxu0 0
    %386 = vmatprep.subr.bf16.mxu0 0
    %387 = vmatpush1.bf16.msra.mxu0 0
    %388 = vmatprep.subr.bf16.mxu0 0
    %389 = vmatpush1.bf16.msra.mxu0 0
    %390 = vmatprep.subr.bf16.mxu0 0
    %391 = vmatpush1.bf16.msra.mxu0 0
    %392 = vmatprep.subr.bf16.mxu0 0
    %393 = vmatpush1.bf16.msra.mxu0 0
    %394 = vmatprep.subr.bf16.mxu0 0
    %395 = vmatpush1.bf16.msra.mxu0 0
    %396 = vmatprep.subr.bf16.mxu0 0
    %397 = vmatpush1.bf16.msra.mxu0 0
    %398 = vmatprep.subr.bf16.mxu0 0
    %399 = vmatpush1.bf16.msra.mxu0 0
    %400 = vmatprep.mubr.bf16.mxu0 0
    %401 = vmatmul.mubr.bf16.gmra.mrb[0].mxu0 %v366
    %v402 = vpop.f32.mrb[0].mxu0
    %v403 = vadd.f32 %v351, %v402
    %v404 = vpop.f32.mrb[0].mxu0
    %v405 = vpop.f32.mrb[0].mxu0
    %v406 = vpop.f32.mrb[0].mxu0
    %407 = vdwg.mxu0
    %s408 = scalar_lea.vmem [#allocation5], 4
    %v409 = vld [vmem:[%s408] sm:$0xf]
    %s410 = scalar_lea.vmem [#allocation7], 2
    %v411 = vld [vmem:[%s410] sm:$0x3]
    %v413 = vsel %vm103, %v411, 0
    %415 = vmatprep.subr.bf16.mxu0 0
    %416 = vmatpush1.bf16.msra.mxu0 %v413
    %417 = vmatprep.subr.bf16.mxu0 0
    %418 = vmatpush1.bf16.msra.mxu0 0
    %419 = vmatprep.subr.bf16.mxu0 0
    %420 = vmatpush1.bf16.msra.mxu0 0
    %421 = vmatprep.subr.bf16.mxu0 0
    %422 = vmatpush1.bf16.msra.mxu0 0
    %423 = vmatprep.subr.bf16.mxu0 0
    %424 = vmatpush1.bf16.msra.mxu0 0
    %425 = vmatprep.subr.bf16.mxu0 0
    %426 = vmatpush1.bf16.msra.mxu0 0
    %427 = vmatprep.subr.bf16.mxu0 0
    %428 = vmatpush1.bf16.msra.mxu0 0
    %429 = vmatprep.subr.bf16.mxu0 0
    %430 = vmatpush1.bf16.msra.mxu0 0
    %431 = vmatprep.subr.bf16.mxu0 0
    %432 = vmatpush1.bf16.msra.mxu0 0
    %433 = vmatprep.subr.bf16.mxu0 0
    %434 = vmatpush1.bf16.msra.mxu0 0
    %435 = vmatprep.subr.bf16.mxu0 0
    %436 = vmatpush1.bf16.msra.mxu0 0
    %437 = vmatprep.subr.bf16.mxu0 0
    %438 = vmatpush1.bf16.msra.mxu0 0
    %439 = vmatprep.subr.bf16.mxu0 0
    %440 = vmatpush1.bf16.msra.mxu0 0
    %441 = vmatprep.subr.bf16.mxu0 0
    %442 = vmatpush1.bf16.msra.mxu0 0
    %443 = vmatprep.subr.bf16.mxu0 0
    %444 = vmatpush1.bf16.msra.mxu0 0
    %445 = vmatprep.subr.bf16.mxu0 0
    %446 = vmatpush1.bf16.msra.mxu0 0
    %447 = vmatprep.mubr.bf16.mxu0 0
    %448 = vmatmul.mubr.bf16.gmra.mrb[0].mxu0 %v101
    %v449 = vpop.f32.mrb[0].mxu0
    %v450 = vadd.f32 0.0, %v449
    %v451 = vpop.f32.mrb[0].mxu0
    %v452 = vpop.f32.mrb[0].mxu0
    %v453 = vpop.f32.mrb[0].mxu0
    %454 = vdwg.mxu0
    %v456 = vsel %vm151, %v409, 0
    %458 = vmatprep.subr.bf16.mxu0 0
    %459 = vmatpush1.bf16.msra.mxu0 %v456
    %460 = vmatprep.subr.bf16.mxu0 0
    %461 = vmatpush1.bf16.msra.mxu0 0
    %462 = vmatprep.subr.bf16.mxu0 0
    %463 = vmatpush1.bf16.msra.mxu0 0
    %464 = vmatprep.subr.bf16.mxu0 0
    %465 = vmatpush1.bf16.msra.mxu0 0
    %466 = vmatprep.subr.bf16.mxu0 0
    %467 = vmatpush1.bf16.msra.mxu0 0
    %468 = vmatprep.subr.bf16.mxu0 0
    %469 = vmatpush1.bf16.msra.mxu0 0
    %470 = vmatprep.subr.bf16.mxu0 0
    %471 = vmatpush1.bf16.msra.mxu0 0
    %472 = vmatprep.subr.bf16.mxu0 0
    %473 = vmatpush1.bf16.msra.mxu0 0
    %474 = vmatprep.subr.bf16.mxu0 0
    %475 = vmatpush1.bf16.msra.mxu0 0
    %476 = vmatprep.subr.bf16.mxu0 0
    %477 = vmatpush1.bf16.msra.mxu0 0
    %478 = vmatprep.subr.bf16.mxu0 0
    %479 = vmatpush1.bf16.msra.mxu0 0
    %480 = vmatprep.subr.bf16.mxu0 0
    %481 = vmatpush1.bf16.msra.mxu0 0
    %482 = vmatprep.subr.bf16.mxu0 0
    %483 = vmatpush1.bf16.msra.mxu0 0
    %484 = vmatprep.subr.bf16.mxu0 0
    %485 = vmatpush1.bf16.msra.mxu0 0
    %486 = vmatprep.subr.bf16.mxu0 0
    %487 = vmatpush1.bf16.msra.mxu0 0
    %488 = vmatprep.subr.bf16.mxu0 0
    %489 = vmatpush1.bf16.msra.mxu0 0
    %490 = vmatprep.mubr.bf16.mxu0 0
    %491 = vmatmul.mubr.bf16.gmra.mrb[0].mxu0 %v149
    %v492 = vpop.f32.mrb[0].mxu0
    %v493 = vadd.f32 %v450, %v492
    %v494 = vpop.f32.mrb[0].mxu0
    %v495 = vpop.f32.mrb[0].mxu0
    %v496 = vpop.f32.mrb[0].mxu0
    %497 = vdwg.mxu0
    %s498 = scalar_lea.vmem %s4, 1
    %v499 = vld [vmem:[%s498] sm:$0x1]
    %v501 = vlaneseq
    %v502 = vshrl.u32 %v501, 7
    %v503 = vsub.s32 0, %v502
    %v504 = vrot.slane %v499, %v503
    %v506 = vadd.f32 %v493, %v504
    %v507 = vmax.f32 %v506, 0.0
    %v508 = vpack.c.bf16 %v507, %v507
    %s509 = scalar_lea.vmem %s5, 16
    %v510 = vld [vmem:[%s509] sm:$0xf]
    %v511 = vld [vmem:[%s509 + $0x4] sm:$0xf]
    %v512 = vld [vmem:[%s509 + $0x8] sm:$0xf]
    %v513 = vld [vmem:[%s509 + $0xc] sm:$0xf]
    %s514 = scalar_lea.vmem [#allocation8], 1
    %v515 = vld [vmem:[%s514] sm:$0x1]
    %v517 = vlaneseq
    %v518 = vshrl.u32 %v517, 7
    %v519 = vsub.s32 0, %v518
    %v520 = vrot.slane %v515, %v519
    %v526 = vunpack.c.l.b16 %v510
    %v527 = vunpack.c.l.b16 %v511
    %v528 = vunpack.c.l.b16 %v512
    %v529 = vunpack.c.l.b16 %v513
    %v530 = vpack.c.b16 %v527, %v526
    %v531 = vpack.c.b16 %v529, %v528
    %v535 = vsel %vm228, %v508, 0
    %537 = vmatprep.subr.bf16.mxu0 0
    %538 = vmatpush1.bf16.msra.mxu0 %v530
    %539 = vmatprep.subr.bf16.mxu0 0
    %540 = vmatpush1.bf16.msra.mxu0 %v531
    %541 = vmatprep.subr.bf16.mxu0 0
    %542 = vmatpush1.bf16.msra.mxu0 0
    %543 = vmatprep.subr.bf16.mxu0 0
    %544 = vmatpush1.bf16.msra.mxu0 0
    %545 = vmatprep.subr.bf16.mxu0 0
    %546 = vmatpush1.bf16.msra.mxu0 0
    %547 = vmatprep.subr.bf16.mxu0 0
    %548 = vmatpush1.bf16.msra.mxu0 0
    %549 = vmatprep.subr.bf16.mxu0 0
    %550 = vmatpush1.bf16.msra.mxu0 0
    %551 = vmatprep.subr.bf16.mxu0 0
    %552 = vmatpush1.bf16.msra.mxu0 0
    %553 = vmatprep.subr.bf16.mxu0 0
    %554 = vmatpush1.bf16.msra.mxu0 0
    %555 = vmatprep.subr.bf16.mxu0 0
    %556 = vmatpush1.bf16.msra.mxu0 0
    %557 = vmatprep.subr.bf16.mxu0 0
    %558 = vmatpush1.bf16.msra.mxu0 0
    %559 = vmatprep.subr.bf16.mxu0 0
    %560 = vmatpush1.bf16.msra.mxu0 0
    %561 = vmatprep.subr.bf16.mxu0 0
    %562 = vmatpush1.bf16.msra.mxu0 0
    %563 = vmatprep.subr.bf16.mxu0 0
    %564 = vmatpush1.bf16.msra.mxu0 0
    %565 = vmatprep.subr.bf16.mxu0 0
    %566 = vmatpush1.bf16.msra.mxu0 0
    %567 = vmatprep.subr.bf16.mxu0 0
    %568 = vmatpush1.bf16.msra.mxu0 0
    %569 = vmatprep.mubr.bf16.mxu0 0
    %570 = vmatmul.mubr.bf16.gmra.mrb[0].mxu0 %v535
    %v571 = vpop.f32.mrb[0].mxu0
    %v572 = vadd.f32 %v520, %v571
    %v573 = vpop.f32.mrb[0].mxu0
    %v574 = vpop.f32.mrb[0].mxu0
    %v575 = vpop.f32.mrb[0].mxu0
    %576 = vdwg.mxu0
    %v577 = vmax.f32 %v572, 0.0
    %v578 = vpack.c.bf16 %v577, %v577
    %s579 = scalar_lea.vmem %s7, 16
    %v580 = vld [vmem:[%s579] sm:$0xf]
    %v581 = vld [vmem:[%s579 + $0x4] sm:$0xf]
    %v582 = vld [vmem:[%s579 + $0x8] sm:$0xf]
    %v583 = vld [vmem:[%s579 + $0xc] sm:$0xf]
    %s584 = scalar_lea.vmem %s8, 1
    %v585 = vld [vmem:[%s584] sm:$0x1]
    %v587 = vlaneseq
    %v588 = vshrl.u32 %v587, 7
    %v589 = vsub.s32 0, %v588
    %v590 = vrot.slane %v585, %v589
    %v596 = vunpack.c.l.b16 %v580
    %v597 = vunpack.c.l.b16 %v581
    %v598 = vunpack.c.l.b16 %v582
    %v599 = vunpack.c.l.b16 %v583
    %v600 = vpack.c.b16 %v597, %v596
    %v601 = vpack.c.b16 %v599, %v598
    %v605 = vsel %vm228, %v578, 0
    %607 = vmatprep.subr.bf16.mxu0 0
    %608 = vmatpush1.bf16.msra.mxu0 %v600
    %609 = vmatprep.subr.bf16.mxu0 0
    %610 = vmatpush1.bf16.msra.mxu0 %v601
    %611 = vmatprep.subr.bf16.mxu0 0
    %612 = vmatpush1.bf16.msra.mxu0 0
    %613 = vmatprep.subr.bf16.mxu0 0
    %614 = vmatpush1.bf16.msra.mxu0 0
    %615 = vmatprep.subr.bf16.mxu0 0
    %616 = vmatpush1.bf16.msra.mxu0 0
    %617 = vmatprep.subr.bf16.mxu0 0
    %618 = vmatpush1.bf16.msra.mxu0 0
    %619 = vmatprep.subr.bf16.mxu0 0
    %620 = vmatpush1.bf16.msra.mxu0 0
    %621 = vmatprep.subr.bf16.mxu0 0
    %622 = vmatpush1.bf16.msra.mxu0 0
    %623 = vmatprep.subr.bf16.mxu0 0
    %624 = vmatpush1.bf16.msra.mxu0 0
    %625 = vmatprep.subr.bf16.mxu0 0
    %626 = vmatpush1.bf16.msra.mxu0 0
    %627 = vmatprep.subr.bf16.mxu0 0
    %628 = vmatpush1.bf16.msra.mxu0 0
    %629 = vmatprep.subr.bf16.mxu0 0
    %630 = vmatpush1.bf16.msra.mxu0 0
    %631 = vmatprep.subr.bf16.mxu0 0
    %632 = vmatpush1.bf16.msra.mxu0 0
    %633 = vmatprep.subr.bf16.mxu0 0
    %634 = vmatpush1.bf16.msra.mxu0 0
    %635 = vmatprep.subr.bf16.mxu0 0
    %636 = vmatpush1.bf16.msra.mxu0 0
    %637 = vmatprep.subr.bf16.mxu0 0
    %638 = vmatpush1.bf16.msra.mxu0 0
    %639 = vmatprep.mubr.bf16.mxu0 0
    %640 = vmatmul.mubr.bf16.gmra.mrb[0].mxu0 %v605
    %v641 = vpop.f32.mrb[0].mxu0
    %v642 = vadd.f32 %v590, %v641
    %v643 = vpop.f32.mrb[0].mxu0
    %v644 = vpop.f32.mrb[0].mxu0
    %v645 = vpop.f32.mrb[0].mxu0
    %646 = vdwg.mxu0
    %v647 = vmax.f32 %v642, 0.0
    %v648 = vpack.c.bf16 %v647, %v647
    %s649 = scalar_lea.vmem %s9, 16
    %v650 = vld [vmem:[%s649] sm:$0xf]
    %v651 = vld [vmem:[%s649 + $0x4] sm:$0xf]
    %v652 = vld [vmem:[%s649 + $0x8] sm:$0xf]
    %v653 = vld [vmem:[%s649 + $0xc] sm:$0xf]
    %s654 = scalar_lea.vmem %s10, 1
    %v655 = vld [vmem:[%s654] sm:$0x1]
    %v657 = vlaneseq
    %v658 = vshrl.u32 %v657, 7
    %v659 = vsub.s32 0, %v658
    %v660 = vrot.slane %v655, %v659
    %v666 = vunpack.c.l.b16 %v650
    %v667 = vunpack.c.l.b16 %v651
    %v668 = vunpack.c.l.b16 %v652
    %v669 = vunpack.c.l.b16 %v653
    %v670 = vpack.c.b16 %v667, %v666
    %v671 = vpack.c.b16 %v669, %v668
    %v675 = vsel %vm228, %v648, 0
    %677 = vmatprep.subr.bf16.mxu0 0
    %678 = vmatpush1.bf16.msra.mxu0 %v670
    %679 = vmatprep.subr.bf16.mxu0 0
    %680 = vmatpush1.bf16.msra.mxu0 %v671
    %681 = vmatprep.subr.bf16.mxu0 0
    %682 = vmatpush1.bf16.msra.mxu0 0
    %683 = vmatprep.subr.bf16.mxu0 0
    %684 = vmatpush1.bf16.msra.mxu0 0
    %685 = vmatprep.subr.bf16.mxu0 0
    %686 = vmatpush1.bf16.msra.mxu0 0
    %687 = vmatprep.subr.bf16.mxu0 0
    %688 = vmatpush1.bf16.msra.mxu0 0
    %689 = vmatprep.subr.bf16.mxu0 0
    %690 = vmatpush1.bf16.msra.mxu0 0
    %691 = vmatprep.subr.bf16.mxu0 0
    %692 = vmatpush1.bf16.msra.mxu0 0
    %693 = vmatprep.subr.bf16.mxu0 0
    %694 = vmatpush1.bf16.msra.mxu0 0
    %695 = vmatprep.subr.bf16.mxu0 0
    %696 = vmatpush1.bf16.msra.mxu0 0
    %697 = vmatprep.subr.bf16.mxu0 0
    %698 = vmatpush1.bf16.msra.mxu0 0
    %699 = vmatprep.subr.bf16.mxu0 0
    %700 = vmatpush1.bf16.msra.mxu0 0
    %701 = vmatprep.subr.bf16.mxu0 0
    %702 = vmatpush1.bf16.msra.mxu0 0
    %703 = vmatprep.subr.bf16.mxu0 0
    %704 = vmatpush1.bf16.msra.mxu0 0
    %705 = vmatprep.subr.bf16.mxu0 0
    %706 = vmatpush1.bf16.msra.mxu0 0
    %707 = vmatprep.subr.bf16.mxu0 0
    %708 = vmatpush1.bf16.msra.mxu0 0
    %709 = vmatprep.mubr.bf16.mxu0 0
    %710 = vmatmul.mubr.bf16.gmra.mrb[0].mxu0 %v675
    %v711 = vpop.f32.mrb[0].mxu0
    %v712 = vadd.f32 %v660, %v711
    %v713 = vpop.f32.mrb[0].mxu0
    %v714 = vpop.f32.mrb[0].mxu0
    %v715 = vpop.f32.mrb[0].mxu0
    %716 = vdwg.mxu0
    %718 = vrot.lane.b32.xlu0 %v712, 8
    %v719 = vpop.permute.xlu0 %718
    %v721 = vsel %vm147, %v403, %v719
    %vm722 = vcmask 130048
    %v723 = vsel %vm722, %v721, 0.0
    %724 = vst [vmem:[#allocation10] sm:$0xff] %v723
    // Predicated region
    $region62: #{tpu_custom_call.1} parent=1 // pred_check
      _
    $region63: #{tpu_custom_call.1} parent=1 // pred_check_branch
      %726 = sbr.rel (0) target = $region65
    $region64: #{tpu_custom_call.1} parent=1 // pred_region
      %s728 = ssub.s32 128, 128
      %729 = vsyncadd [#allocation4], %s728
      %s731 = sshll.u32 [#allocation10], 4
      %s732 = int_to_ptr.vmem [resolvable:$true] %s731
      %734 = dma.vmem_to_hbm [thread:$0]  %s732, 128, %s11, [#allocation4]
    $region65: #{tpu_custom_call.1} parent=1 // pred_fallthru
      _
    // Predicated region
    $region66: #{tpu_custom_call.1} parent=1 // pred_check
      _
    $region67: #{tpu_custom_call.1} parent=1 // pred_check_branch
      %736 = sbr.rel (0) target = $region69
    $region68: #{tpu_custom_call.1} parent=1 // pred_region
      %737 = dma.done [#allocation4], 128
    $region69: #{tpu_custom_call.1} parent=1 // pred_fallthru
      _
    %738 = vsyncpa [#allocation3], 1
    %739 = vsyncpa [#allocation6], 1
    %740 = vsyncpa [#allocation9], 1
    %741 = vsyncpa [#allocation4], 1

</llo_original>
